<compile_context>
chip_gen: v7x
topology: tpu7x:2x2x1
jax: 0.10.0
libtpu: 0.0.40
codegen_flags: <defaults>
</compile_context>

<pallas_src>
import functools

import jax
import jax.numpy as jnp
from jax import lax
from jax.experimental import pallas as pl
from jax.experimental.pallas import tpu as pltpu

EMBEDDING = 50
WINDOW_SIZE = 5
DROPOUT_P = 0.5          # F.dropout default (inverted scaling 1/(1-p) = 2.0)
LANE = 128


def _round_up(x, m):
    return ((x + m - 1) // m) * m


def _nnmodel_kernel(seed_ref, tok_ref, w1f_ref, b1_ref, w2_ref, b2_ref,
                    out_ref, *, training, vp):
    TB = tok_ref.shape[0]             # batch rows in this block
    WVP = w1f_ref.shape[0]            # WINDOW_SIZE * vp
    HP = w1f_ref.shape[1]             # padded hidden (128-multiple)

    toks = tok_ref[...]                                          # (TB, W) int32
    col_ids = lax.broadcasted_iota(jnp.int32, (TB, WVP), 1)      # (TB, W*Vp)

    # One-hot over the concatenated (window, vocab) axis, built with purely
    # elementwise ops: window w's token can only match inside [w*vp, w*vp + V).
    onehot = jnp.zeros((TB, WVP), jnp.float32)
    for w in range(WINDOW_SIZE):                                 # static unroll (5)
        onehot = onehot + ((toks[:, w:w + 1] + w * vp) == col_ids).astype(jnp.float32)
    onehot = onehot.astype(jnp.bfloat16)                         # exact 0/1

    # Single fused gather + hidden matmul (embedding already folded into W1).
    acc = jnp.dot(onehot, w1f_ref[...], preferred_element_type=jnp.float32)
    h = jnp.tanh(acc + b1_ref[...])                              # (TB, HP) f32

    if training:
        # Stateless uint32 hash -> Bernoulli(0.5) keep mask, inverted dropout.
        # TODO(synk): not bitwise-identical to torch's RNG (statistically equivalent).
        row0 = pl.program_id(0) * TB
        rows = (lax.broadcasted_iota(jnp.int32, (TB, HP), 0) + row0).astype(jnp.uint32)
        cols = lax.broadcasted_iota(jnp.int32, (TB, HP), 1).astype(jnp.uint32)
        z = rows * jnp.uint32(HP) + cols
        z = z + seed_ref[0].astype(jnp.uint32) * jnp.uint32(2654435761)
        z = z ^ (z >> 16)
        z = z * jnp.uint32(0x7FEB352D)
        z = z ^ (z >> 15)
        z = z * jnp.uint32(0x846CA68B)
        z = z ^ (z >> 16)
        keep = (z >> 31) == jnp.uint32(0)                        # p(keep) = 0.5
        h = jnp.where(keep, h * 2.0, 0.0)                        # scale 1/(1-p)

    logits = jnp.dot(h, w2_ref[...], preferred_element_type=jnp.float32)
    logits = logits + b2_ref[...]                                # padded cols = -1e30
    m = jnp.max(logits, axis=1, keepdims=True)
    e = jnp.exp(logits - m)
    s = jnp.sum(e, axis=1, keepdims=True)
    out_ref[...] = e * pl.reciprocal(s, approx=True)             # divide on the EUP


def prepare_params(emb_table, w1, b1, w2, b2):
    """Fold the embedding into W1 and pad everything to lane-dense layouts."""
    V, E = emb_table.shape
    K, H = w1.shape
    O = w2.shape[1]
    assert E == EMBEDDING and K == EMBEDDING * WINDOW_SIZE

    VP = _round_up(V, LANE)              # per-window one-hot width
    HP = _round_up(H, LANE)              # 100 -> 128
    OP = _round_up(O, LANE)              # 10  -> 128

    # W1f[w] = emb_table @ W1[w]  -> (W, V, H), padded & flattened to (W*Vp, Hp).
    w1_r = w1.astype(jnp.float32).reshape(WINDOW_SIZE, EMBEDDING, H)
    w1f = jnp.einsum('ve,weh->wvh', emb_table.astype(jnp.float32), w1_r)
    w1f_p = jnp.zeros((WINDOW_SIZE, VP, HP), jnp.float32).at[:, :V, :H].set(w1f)
    w1f_p = w1f_p.reshape(WINDOW_SIZE * VP, HP).astype(jnp.bfloat16)

    b1_p = jnp.zeros((1, HP), jnp.float32).at[0, :H].set(b1.astype(jnp.float32))
    w2_p = jnp.zeros((HP, OP), jnp.float32).at[:H, :O].set(w2.astype(jnp.float32))
    # padded logit columns get -1e30 so exp() kills them in the softmax
    b2_p = jnp.full((1, OP), -1e30, jnp.float32).at[0, :O].set(b2.astype(jnp.float32))

    return dict(w1f=w1f_p, b1=b1_p, w2=w2_p, b2=b2_p,
                hidden=H, out=O, vocab=V, vp=VP)


def nnmodel_forward(tokens, params, *, seed=0, training=True):
    """tokens: int32 [B, WINDOW_SIZE]; returns softmax probs [B, output_size]."""
    B = tokens.shape[0]
    O = params["out"]
    VP = params["vp"]
    WVP, HP = params["w1f"].shape
    OP = params["w2"].shape[1]

    # Batch tile: multiple of 16 (bf16 sublane packing), capped at 256 so any
    # B > 256 exposes >= 2 parallel grid steps (v7x: 2 TensorCores per chip).
    TB = min(256, _round_up(B, 16))
    Bp = _round_up(B, TB)
    tok_p = jnp.zeros((Bp, WINDOW_SIZE), jnp.int32).at[:B].set(tokens.astype(jnp.int32))
    seed_arr = jnp.array([seed], dtype=jnp.int32)

    kernel = functools.partial(_nnmodel_kernel, training=training, vp=VP)

    # Explicit VMEM budget: double-buffered weights/blocks + in-kernel temps.
    weight_bytes = sum(int(params[k].size) * params[k].dtype.itemsize
                       for k in ("w1f", "b1", "w2", "b2"))
    block_bytes = TB * WINDOW_SIZE * 4 + TB * OP * 4
    temp_bytes = TB * WVP * 6 + TB * HP * 16          # one-hot (f32+bf16) + h/acc
    vmem_limit = min(48 * 1024 * 1024,
                     max(8 * 1024 * 1024,
                         2 * (weight_bytes + block_bytes) + temp_bytes + (2 << 20)))

    out_p = pl.pallas_call(
        kernel,
        out_shape=jax.ShapeDtypeStruct((Bp, OP), jnp.float32),
        grid=(Bp // TB,),
        in_specs=[
            pl.BlockSpec(memory_space=pltpu.MemorySpace.SMEM),          # seed
            pl.BlockSpec((TB, WINDOW_SIZE), lambda i: (i, 0)),          # tokens
            pl.BlockSpec((WVP, HP), lambda i: (0, 0)),                  # folded W1 (bf16)
            pl.BlockSpec((1, HP), lambda i: (0, 0)),                    # b1
            pl.BlockSpec((HP, OP), lambda i: (0, 0)),                   # W2
            pl.BlockSpec((1, OP), lambda i: (0, 0)),                    # b2
        ],
        out_specs=pl.BlockSpec((TB, OP), lambda i: (i, 0)),
        compiler_params=pltpu.CompilerParams(
            dimension_semantics=("parallel",),
            vmem_limit_bytes=int(vmem_limit)),
    )(seed_arr, tok_p, params["w1f"], params["b1"], params["w2"], params["b2"])

    return out_p[:B, :O]


if __name__ == "__main__":
    # Small deterministic setup consistent with the module defaults.
    batch = 8
    vocab = 64
    hidden_size = 100      # module default
    output_size = 10

    key = jax.random.PRNGKey(0)
    k_emb, k_w1, k_b1, k_w2, k_b2, k_tok = jax.random.split(key, 6)

    emb_table = jax.random.normal(k_emb, (vocab, EMBEDDING), jnp.float32) * 0.1
    w1 = jax.random.normal(k_w1, (EMBEDDING * WINDOW_SIZE, hidden_size), jnp.float32) * 0.05
    b1 = jax.random.normal(k_b1, (hidden_size,), jnp.float32) * 0.01
    w2 = jax.random.normal(k_w2, (hidden_size, output_size), jnp.float32) * 0.05
    b2 = jax.random.normal(k_b2, (output_size,), jnp.float32) * 0.01
    tokens = jax.random.randint(k_tok, (batch, WINDOW_SIZE), 0, vocab, dtype=jnp.int32)

    # TODO(synk): for very large vocabularies the (TB, W*Vp) one-hot and the
    # resident folded-W1 stop fitting VMEM (worst on v7x's 64 MiB); that regime
    # needs a vocab-tiled accumulate or a DMA row-gather path instead.
    params = prepare_params(emb_table, w1, b1, w2, b2)

    # Faithful forward (F.dropout default => training=True dropout applied).
    probs = nnmodel_forward(tokens, params, seed=0, training=True)
    probs = jax.block_until_ready(probs)

    assert probs.shape == (batch, output_size)
    row_sums = jnp.sum(probs, axis=1)
    assert bool(jnp.all(jnp.abs(row_sums - 1.0) < 5e-3))   # approx reciprocal

    # Extra validation of the folded-gather / padded / bf16 math (no dropout).
    eval_probs = nnmodel_forward(tokens, params, seed=0, training=False)
    x_flat = jnp.take(emb_table, tokens, axis=0).reshape(batch, EMBEDDING * WINDOW_SIZE)
    h_ref = jnp.tanh(x_flat @ w1 + b1)
    ref = jax.nn.softmax(h_ref @ w2 + b2, axis=1)
    assert bool(jnp.all(jnp.abs(eval_probs - ref) < 5e-3))

    print("KERNEL_OK")
</pallas_src>

<mosaic_0001>
module attributes {stable_mosaic.version = 11 : i64} {
  func.func @_nnmodel_kernel(%arg0: i32, %arg1: memref<1xi32, #tpu.memory_space<smem>>, %arg2: memref<16x5xi32, #tpu.memory_space<vmem>>, %arg3: memref<640x128xbf16, #tpu.memory_space<vmem>>, %arg4: memref<1x128xf32, #tpu.memory_space<vmem>>, %arg5: memref<128x128xf32, #tpu.memory_space<vmem>>, %arg6: memref<1x128xf32, #tpu.memory_space<vmem>>, %arg7: memref<16x128xf32, #tpu.memory_space<vmem>>) attributes {dimension_semantics = [#tpu.dimension_semantics<parallel>], iteration_bounds = array<i64: 1>, scalar_prefetch = 0 : i64, scratch_operands = 0 : i64, tpu.core_type = #tpu.core_type<tc>, window_params = [{transform_indices = @transform_0, window_bounds = array<i64: 1>}, {transform_indices = @transform_1, window_bounds = array<i64: 16, 5>}, {pipeline_mode = #tpu.pipeline_mode<synchronous>, transform_indices = @transform_2, window_bounds = array<i64: 640, 128>}, {pipeline_mode = #tpu.pipeline_mode<synchronous>, transform_indices = @transform_3, window_bounds = array<i64: 1, 128>}, {pipeline_mode = #tpu.pipeline_mode<synchronous>, transform_indices = @transform_4, window_bounds = array<i64: 128, 128>}, {pipeline_mode = #tpu.pipeline_mode<synchronous>, transform_indices = @transform_5, window_bounds = array<i64: 1, 128>}, {transform_indices = @transform_6, window_bounds = array<i64: 16, 128>}]} {
    %c0 = arith.constant 0 : index
    %c0_0 = arith.constant 0 : index
    %0 = vector.load %arg2[%c0, %c0_0] : memref<16x5xi32, #tpu.memory_space<vmem>>, vector<16x5xi32>
    %1 = tpu.iota {dimensions = array<i32: 1>} : vector<16x640xi32>
    %cst = arith.constant 0.000000e+00 : f32
    %2 = vector.broadcast %cst : f32 to vector<16x640xf32>
    %3 = vector.extract_strided_slice %0 {offsets = [0, 0], sizes = [16, 1], strides = [1, 1]} : vector<16x5xi32> to vector<16x1xi32>
    %c0_i32 = arith.constant 0 : i32
    %4 = vector.broadcast %c0_i32 : i32 to vector<16x1xi32>
    %5 = arith.addi %3, %4 : vector<16x1xi32>
    %6 = vector.broadcast %5 : vector<16x1xi32> to vector<16x640xi32>
    %7 = arith.cmpi eq, %6, %1 : vector<16x640xi32>
    %8 = arith.extui %7 : vector<16x640xi1> to vector<16x640xi32>
    %9 = arith.sitofp %8 : vector<16x640xi32> to vector<16x640xf32>
    %10 = arith.addf %2, %9 : vector<16x640xf32>
    %11 = vector.extract_strided_slice %0 {offsets = [0, 1], sizes = [16, 1], strides = [1, 1]} : vector<16x5xi32> to vector<16x1xi32>
    %c128_i32 = arith.constant 128 : i32
    %12 = vector.broadcast %c128_i32 : i32 to vector<16x1xi32>
    %13 = arith.addi %11, %12 : vector<16x1xi32>
    %14 = vector.broadcast %13 : vector<16x1xi32> to vector<16x640xi32>
    %15 = arith.cmpi eq, %14, %1 : vector<16x640xi32>
    %16 = arith.extui %15 : vector<16x640xi1> to vector<16x640xi32>
    %17 = arith.sitofp %16 : vector<16x640xi32> to vector<16x640xf32>
    %18 = arith.addf %10, %17 : vector<16x640xf32>
    %19 = vector.extract_strided_slice %0 {offsets = [0, 2], sizes = [16, 1], strides = [1, 1]} : vector<16x5xi32> to vector<16x1xi32>
    %c256_i32 = arith.constant 256 : i32
    %20 = vector.broadcast %c256_i32 : i32 to vector<16x1xi32>
    %21 = arith.addi %19, %20 : vector<16x1xi32>
    %22 = vector.broadcast %21 : vector<16x1xi32> to vector<16x640xi32>
    %23 = arith.cmpi eq, %22, %1 : vector<16x640xi32>
    %24 = arith.extui %23 : vector<16x640xi1> to vector<16x640xi32>
    %25 = arith.sitofp %24 : vector<16x640xi32> to vector<16x640xf32>
    %26 = arith.addf %18, %25 : vector<16x640xf32>
    %27 = vector.extract_strided_slice %0 {offsets = [0, 3], sizes = [16, 1], strides = [1, 1]} : vector<16x5xi32> to vector<16x1xi32>
    %c384_i32 = arith.constant 384 : i32
    %28 = vector.broadcast %c384_i32 : i32 to vector<16x1xi32>
    %29 = arith.addi %27, %28 : vector<16x1xi32>
    %30 = vector.broadcast %29 : vector<16x1xi32> to vector<16x640xi32>
    %31 = arith.cmpi eq, %30, %1 : vector<16x640xi32>
    %32 = arith.extui %31 : vector<16x640xi1> to vector<16x640xi32>
    %33 = arith.sitofp %32 : vector<16x640xi32> to vector<16x640xf32>
    %34 = arith.addf %26, %33 : vector<16x640xf32>
    %35 = vector.extract_strided_slice %0 {offsets = [0, 4], sizes = [16, 1], strides = [1, 1]} : vector<16x5xi32> to vector<16x1xi32>
    %c512_i32 = arith.constant 512 : i32
    %36 = vector.broadcast %c512_i32 : i32 to vector<16x1xi32>
    %37 = arith.addi %35, %36 : vector<16x1xi32>
    %38 = vector.broadcast %37 : vector<16x1xi32> to vector<16x640xi32>
    %39 = arith.cmpi eq, %38, %1 : vector<16x640xi32>
    %40 = arith.extui %39 : vector<16x640xi1> to vector<16x640xi32>
    %41 = arith.sitofp %40 : vector<16x640xi32> to vector<16x640xf32>
    %42 = arith.addf %34, %41 : vector<16x640xf32>
    %43 = arith.truncf %42 : vector<16x640xf32> to vector<16x640xbf16>
    %c0_1 = arith.constant 0 : index
    %c0_2 = arith.constant 0 : index
    %44 = vector.load %arg3[%c0_1, %c0_2] : memref<640x128xbf16, #tpu.memory_space<vmem>>, vector<640x128xbf16>
    %cst_3 = arith.constant dense<0.000000e+00> : vector<16x128xf32>
    %45 = tpu.matmul %43, %44, %cst_3 {dimension_numbers = #tpu.dot_dimension_numbers<[1], [0], [0], [1], [0, 0, 1, 1], [], []>} : vector<16x640xbf16>, vector<640x128xbf16>, vector<16x128xf32> -> vector<16x128xf32>
    %c0_4 = arith.constant 0 : index
    %c0_5 = arith.constant 0 : index
    %46 = vector.load %arg4[%c0_4, %c0_5] : memref<1x128xf32, #tpu.memory_space<vmem>>, vector<1x128xf32>
    %47 = vector.broadcast %46 : vector<1x128xf32> to vector<16x128xf32>
    %48 = arith.addf %45, %47 : vector<16x128xf32>
    %49 = math.tanh %48 : vector<16x128xf32>
    %c16_i32 = arith.constant 16 : i32
    %50 = arith.muli %arg0, %c16_i32 : i32
    %51 = tpu.iota {dimensions = array<i32: 0>} : vector<16x128xi32>
    %52 = vector.broadcast %50 : i32 to vector<16x128xi32>
    %53 = arith.addi %51, %52 : vector<16x128xi32>
    %54 = tpu.iota {dimensions = array<i32: 1>} : vector<16x128xi32>
    %c128_i32_6 = arith.constant 128 : i32
    %55 = vector.broadcast %c128_i32_6 : i32 to vector<16x128xi32>
    %56 = arith.muli %53, %55 : vector<16x128xi32>
    %57 = arith.addi %56, %54 : vector<16x128xi32>
    %c0_7 = arith.constant 0 : index
    %58 = memref.load %arg1[%c0_7] : memref<1xi32, #tpu.memory_space<smem>>
    %c-1640531535_i32 = arith.constant -1640531535 : i32
    %59 = arith.muli %58, %c-1640531535_i32 : i32
    %60 = vector.broadcast %59 : i32 to vector<16x128xi32>
    %61 = arith.addi %57, %60 : vector<16x128xi32>
    %c16_i32_8 = arith.constant 16 : i32
    %62 = vector.broadcast %c16_i32_8 : i32 to vector<16x128xi32>
    %63 = arith.shrui %61, %62 : vector<16x128xi32>
    %64 = arith.xori %61, %63 : vector<16x128xi32>
    %c2146121005_i32 = arith.constant 2146121005 : i32
    %65 = vector.broadcast %c2146121005_i32 : i32 to vector<16x128xi32>
    %66 = arith.muli %64, %65 : vector<16x128xi32>
    %c15_i32 = arith.constant 15 : i32
    %67 = vector.broadcast %c15_i32 : i32 to vector<16x128xi32>
    %68 = arith.shrui %66, %67 : vector<16x128xi32>
    %69 = arith.xori %66, %68 : vector<16x128xi32>
    %c-2073254261_i32 = arith.constant -2073254261 : i32
    %70 = vector.broadcast %c-2073254261_i32 : i32 to vector<16x128xi32>
    %71 = arith.muli %69, %70 : vector<16x128xi32>
    %c16_i32_9 = arith.constant 16 : i32
    %72 = vector.broadcast %c16_i32_9 : i32 to vector<16x128xi32>
    %73 = arith.shrui %71, %72 : vector<16x128xi32>
    %74 = arith.xori %71, %73 : vector<16x128xi32>
    %c31_i32 = arith.constant 31 : i32
    %75 = vector.broadcast %c31_i32 : i32 to vector<16x128xi32>
    %76 = arith.shrui %74, %75 : vector<16x128xi32>
    %c0_i32_10 = arith.constant 0 : i32
    %77 = vector.broadcast %c0_i32_10 : i32 to vector<16x128xi32>
    %78 = arith.cmpi eq, %76, %77 : vector<16x128xi32>
    %cst_11 = arith.constant 2.000000e+00 : f32
    %79 = vector.broadcast %cst_11 : f32 to vector<16x128xf32>
    %80 = arith.mulf %49, %79 : vector<16x128xf32>
    %cst_12 = arith.constant 0.000000e+00 : f32
    %81 = vector.broadcast %cst_12 : f32 to vector<16x128xf32>
    %82 = arith.select %78, %80, %81 : vector<16x128xi1>, vector<16x128xf32>
    %c0_13 = arith.constant 0 : index
    %c0_14 = arith.constant 0 : index
    %83 = vector.load %arg5[%c0_13, %c0_14] : memref<128x128xf32, #tpu.memory_space<vmem>>, vector<128x128xf32>
    %cst_15 = arith.constant dense<0.000000e+00> : vector<16x128xf32>
    %84 = tpu.matmul %82, %83, %cst_15 {dimension_numbers = #tpu.dot_dimension_numbers<[1], [0], [0], [1], [0, 0, 1, 1], [], []>} : vector<16x128xf32>, vector<128x128xf32>, vector<16x128xf32> -> vector<16x128xf32>
    %c0_16 = arith.constant 0 : index
    %c0_17 = arith.constant 0 : index
    %85 = vector.load %arg6[%c0_16, %c0_17] : memref<1x128xf32, #tpu.memory_space<vmem>>, vector<1x128xf32>
    %86 = vector.broadcast %85 : vector<1x128xf32> to vector<16x128xf32>
    %87 = arith.addf %84, %86 : vector<16x128xf32>
    %cst_18 = arith.constant dense<0xFF800000> : vector<16xf32>
    %88 = vector.multi_reduction <maximumf>, %87, %cst_18 [1] : vector<16x128xf32> to vector<16xf32>
    %89 = vector.shape_cast %88 : vector<16xf32> to vector<16x1xf32>
    %90 = vector.broadcast %89 : vector<16x1xf32> to vector<16x128xf32>
    %91 = arith.subf %87, %90 : vector<16x128xf32>
    %92 = math.exp %91 : vector<16x128xf32>
    %cst_19 = arith.constant dense<0.000000e+00> : vector<16xf32>
    %93 = vector.multi_reduction <add>, %92, %cst_19 [1] : vector<16x128xf32> to vector<16xf32>
    %94 = vector.shape_cast %93 : vector<16xf32> to vector<16x1xf32>
    %95 = tpu.reciprocal %94 {approx = true} : vector<16x1xf32> -> vector<16x1xf32>
    %96 = vector.broadcast %95 : vector<16x1xf32> to vector<16x128xf32>
    %97 = arith.mulf %92, %96 : vector<16x128xf32>
    %c0_20 = arith.constant 0 : index
    %c0_21 = arith.constant 0 : index
    %98 = vector.load %arg7[%c0_20, %c0_21] : memref<16x128xf32, #tpu.memory_space<vmem>>, vector<16x128xf32>
    tpu.vector_store %arg7[%c0_20, %c0_21], %97 {strides = array<i32>} : memref<16x128xf32, #tpu.memory_space<vmem>>, vector<16x128xf32>,
    return
  }
  func.func @transform_0(%arg0: i32) -> i32 {
    %c0_i32 = arith.constant 0 : i32
    %c0_i32_0 = arith.constant 0 : i32
    return %c0_i32 : i32
  }
  func.func @transform_1(%arg0: i32) -> (i32, i32) {
    %c0_i32 = arith.constant 0 : i32
    %c0_i32_0 = arith.constant 0 : i32
    return %arg0, %c0_i32 : i32, i32
  }
  func.func @transform_2(%arg0: i32) -> (i32, i32) {
    %c0_i32 = arith.constant 0 : i32
    %c0_i32_0 = arith.constant 0 : i32
    %c0_i32_1 = arith.constant 0 : i32
    return %c0_i32, %c0_i32_0 : i32, i32
  }
  func.func @transform_3(%arg0: i32) -> (i32, i32) {
    %c0_i32 = arith.constant 0 : i32
    %c0_i32_0 = arith.constant 0 : i32
    %c0_i32_1 = arith.constant 0 : i32
    return %c0_i32, %c0_i32_0 : i32, i32
  }
  func.func @transform_4(%arg0: i32) -> (i32, i32) {
    %c0_i32 = arith.constant 0 : i32
    %c0_i32_0 = arith.constant 0 : i32
    %c0_i32_1 = arith.constant 0 : i32
    return %c0_i32, %c0_i32_0 : i32, i32
  }
  func.func @transform_5(%arg0: i32) -> (i32, i32) {
    %c0_i32 = arith.constant 0 : i32
    %c0_i32_0 = arith.constant 0 : i32
    %c0_i32_1 = arith.constant 0 : i32
    return %c0_i32, %c0_i32_0 : i32, i32
  }
  func.func @transform_6(%arg0: i32) -> (i32, i32) {
    %c0_i32 = arith.constant 0 : i32
    %c0_i32_0 = arith.constant 0 : i32
    return %arg0, %c0_i32 : i32, i32
  }
}

</mosaic_0001>

<llo_original>
// kernel: tpu_custom_call.1
$region0: #{tpu_custom_call.1}
  #allocation0 [shape = 'u32[]', space=smem, size = 0x4, offset = 0x4, fixed_abs, tag = 'smem constant byte address 0x4 - core index']
  #allocation1 [shape = 'u32[144,128]{1,0:T(1,128)}', space=vmem, size = 0x12000, scoped, tag = 'internal scratch']
  #allocation2 [shape = 's32[1]{0:T(128)S(6)}', space=smem, size = 0x200, scoped, tag = 'scoped memory for tpu_custom_call.1']
  %s0 = inlined_call_operand.<no memory space> [shape: s32[1], index: 0, kind: input, shape index: {}]
  %s1 = inlined_call_operand.vmem [shape: s32[16,5], index: 1, kind: input, shape index: {}]
  %s2 = inlined_call_operand.hbm [shape: bf16[640,128], index: 2, kind: input, shape index: {}]
  %s3 = inlined_call_operand.vmem [shape: f32[1,128], index: 3, kind: input, shape index: {}]
  %s4 = inlined_call_operand.hbm [shape: f32[128,128], index: 4, kind: input, shape index: {}]
  %s5 = inlined_call_operand.vmem [shape: f32[1,128], index: 5, kind: input, shape index: {}]
  %s6 = inlined_call_operand.hbm [shape: f32[16,128], index: 6, kind: output, shape index: {}]
  %s7 = sld [smem:[#allocation0]]
  $region42: #{tpu_custom_call.1} parent=0
    _
  %s9 = ssub.s32 1, %s7
  %s10 = scalar_select 0, %s9, %s7
  %11 = sst [smem:[#allocation2]] %s0
  $region1: #{tpu_custom_call.1} parent=0
    #allocation3 [shape = 'u8[163840]{0}', space=vmem, size = 0x28000, scoped, tag = 'input window, operand 2, single buffered']
    #allocation4 [shape = 's32[1]{0}', space=sflag, size = 0x4, scoped, tag = 'scoped memory for tpu_custom_call.1']
    #allocation5 [shape = 's32[1]{0}', space=sflag, size = 0x4, scoped, tag = 'scoped memory for tpu_custom_call.1']
    #allocation6 [shape = 'u8[65536]{0}', space=vmem, size = 0x10000, scoped, tag = 'input window, operand 4, single buffered']
    #allocation7 [shape = 's32[1]{0}', space=sflag, size = 0x4, scoped, tag = 'scoped memory for tpu_custom_call.1']
    #allocation8 [shape = 'u8[8192]{0}', space=vmem, size = 0x2000, scoped, tag = 'output window, operand 0, single buffered']
    %12 = vsyncpa [#allocation4], 0
    %13 = vsyncpa [#allocation7], 0
    %14 = vsyncpa [#allocation5], 0
    // Predicated region
    $region2: #{tpu_custom_call.1} parent=1 // pred_check
      _
    $region3: #{tpu_custom_call.1} parent=1 // pred_check_branch
      %16 = sbr.rel (0) target = $region5
    $region4: #{tpu_custom_call.1} parent=1 // pred_region
      _
    $region5: #{tpu_custom_call.1} parent=1 // pred_fallthru
      _
    // Predicated region
    $region6: #{tpu_custom_call.1} parent=1 // pred_check
      _
    $region7: #{tpu_custom_call.1} parent=1 // pred_check_branch
      %18 = sbr.rel (0) target = $region9
    $region8: #{tpu_custom_call.1} parent=1 // pred_region
      _
    $region9: #{tpu_custom_call.1} parent=1 // pred_fallthru
      _
    // Predicated region
    $region10: #{tpu_custom_call.1} parent=1 // pred_check
      _
    $region11: #{tpu_custom_call.1} parent=1 // pred_check_branch
      %20 = sbr.rel (0) target = $region13
    $region12: #{tpu_custom_call.1} parent=1 // pred_region
      %s22 = ssub.s32 5120, 5120
      %23 = vsyncadd [#allocation4], %s22
      %s24 = sshll.u32 [#allocation3], 4
      %s25 = int_to_ptr.vmem [resolvable:$true] %s24
      %30 = dma.hbm_to_vmem [thread:$0]  %s2, 5120, %s25, [#allocation4], 64, 64, 4
    $region13: #{tpu_custom_call.1} parent=1 // pred_fallthru
      _
    // Predicated region
    $region14: #{tpu_custom_call.1} parent=1 // pred_check
      _
    $region15: #{tpu_custom_call.1} parent=1 // pred_check_branch
      %32 = sbr.rel (0) target = $region17
    $region16: #{tpu_custom_call.1} parent=1 // pred_region
      _
    $region17: #{tpu_custom_call.1} parent=1 // pred_fallthru
      _
    // Predicated region
    $region18: #{tpu_custom_call.1} parent=1 // pred_check
      _
    $region19: #{tpu_custom_call.1} parent=1 // pred_check_branch
      %34 = sbr.rel (0) target = $region21
    $region20: #{tpu_custom_call.1} parent=1 // pred_region
      %s36 = ssub.s32 2048, 2048
      %37 = vsyncadd [#allocation7], %s36
      %s38 = sshll.u32 [#allocation6], 4
      %s39 = int_to_ptr.vmem [resolvable:$true] %s38
      %44 = dma.hbm_to_vmem [thread:$0]  %s4, 2048, %s39, [#allocation7], 128, 128, 8
    $region21: #{tpu_custom_call.1} parent=1 // pred_fallthru
      _
    // Predicated region
    $region22: #{tpu_custom_call.1} parent=1 // pred_check
      _
    $region23: #{tpu_custom_call.1} parent=1 // pred_check_branch
      %46 = sbr.rel (0) target = $region25
    $region24: #{tpu_custom_call.1} parent=1 // pred_region
      _
    $region25: #{tpu_custom_call.1} parent=1 // pred_fallthru
      _
    // Predicated region
    $region26: #{tpu_custom_call.1} parent=1 // pred_check
      _
    $region27: #{tpu_custom_call.1} parent=1 // pred_check_branch
      %48 = sbr.rel (0) target = $region29
    $region28: #{tpu_custom_call.1} parent=1 // pred_region
      %49 = dma.done [#allocation4], 5120
    $region29: #{tpu_custom_call.1} parent=1 // pred_fallthru
      _
    // Predicated region
    $region30: #{tpu_custom_call.1} parent=1 // pred_check
      _
    $region31: #{tpu_custom_call.1} parent=1 // pred_check_branch
      %51 = sbr.rel (0) target = $region33
    $region32: #{tpu_custom_call.1} parent=1 // pred_region
      %52 = dma.done [#allocation7], 2048
    $region33: #{tpu_custom_call.1} parent=1 // pred_fallthru
      _
    %v54 = vld [vmem:[%s1] sm:$0xff]
    %v55 = vld [vmem:[%s1 + $0x8] sm:$0xff]
    %v56 = vlaneseq
    %v57 = vand.u32 %v56, 127
    %v58 = vadd.s32 %v57, 128
    %v59 = vadd.s32 %v57, 256
    %v60 = vadd.s32 %v57, 384
    %v61 = vadd.s32 %v57, 512
    %62 = vset.pattern.permute.xlu0 0
    %63 = vperm.xlu0 %62, %v54
    %v64 = vpop.permute.xlu0 %63
    %65 = vset.pattern.permute.xlu0 0
    %66 = vperm.xlu0 %65, %v55
    %v67 = vpop.permute.xlu0 %66
    %vm68 = vcmp.eq.s32.totalorder %v64, %v57
    %vm69 = vcmp.eq.s32.totalorder %v64, %v58
    %vm70 = vcmp.eq.s32.totalorder %v64, %v59
    %vm71 = vcmp.eq.s32.totalorder %v64, %v60
    %vm72 = vcmp.eq.s32.totalorder %v64, %v61
    %vm73 = vcmp.eq.s32.totalorder %v67, %v57
    %vm74 = vcmp.eq.s32.totalorder %v67, %v58
    %vm75 = vcmp.eq.s32.totalorder %v67, %v59
    %vm76 = vcmp.eq.s32.totalorder %v67, %v60
    %vm77 = vcmp.eq.s32.totalorder %v67, %v61
    %v78 = vsel %vm68, 1, 0
    %v79 = vsel %vm69, 1, 0
    %v80 = vsel %vm70, 1, 0
    %v81 = vsel %vm71, 1, 0
    %v82 = vsel %vm72, 1, 0
    %v83 = vsel %vm73, 1, 0
    %v84 = vsel %vm74, 1, 0
    %v85 = vsel %vm75, 1, 0
    %v86 = vsel %vm76, 1, 0
    %v87 = vsel %vm77, 1, 0
    %v88 = vcvt.s32.f32 %v78
    %v89 = vcvt.s32.f32 %v79
    %v90 = vcvt.s32.f32 %v80
    %v91 = vcvt.s32.f32 %v81
    %v92 = vcvt.s32.f32 %v82
    %v93 = vcvt.s32.f32 %v83
    %v94 = vcvt.s32.f32 %v84
    %v95 = vcvt.s32.f32 %v85
    %v96 = vcvt.s32.f32 %v86
    %v97 = vcvt.s32.f32 %v87
    %v98 = vadd.f32 %v88, 0.0
    %v99 = vadd.f32 %v89, 0.0
    %v100 = vadd.f32 %v90, 0.0
    %v101 = vadd.f32 %v91, 0.0
    %v102 = vadd.f32 %v92, 0.0
    %v103 = vadd.f32 %v93, 0.0
    %v104 = vadd.f32 %v94, 0.0
    %v105 = vadd.f32 %v95, 0.0
    %v106 = vadd.f32 %v96, 0.0
    %v107 = vadd.f32 %v97, 0.0
    %v108 = vadd.s32 %v54, 128
    %v109 = vadd.s32 %v55, 128
    %110 = vset.pattern.permute.xlu0 1
    %111 = vperm.xlu0 %110, %v108
    %v112 = vpop.permute.xlu0 %111
    %113 = vset.pattern.permute.xlu0 1
    %114 = vperm.xlu0 %113, %v109
    %v115 = vpop.permute.xlu0 %114
    %vm116 = vcmp.eq.s32.totalorder %v112, %v57
    %vm117 = vcmp.eq.s32.totalorder %v112, %v58
    %vm118 = vcmp.eq.s32.totalorder %v112, %v59
    %vm119 = vcmp.eq.s32.totalorder %v112, %v60
    %vm120 = vcmp.eq.s32.totalorder %v112, %v61
    %vm121 = vcmp.eq.s32.totalorder %v115, %v57
    %vm122 = vcmp.eq.s32.totalorder %v115, %v58
    %vm123 = vcmp.eq.s32.totalorder %v115, %v59
    %vm124 = vcmp.eq.s32.totalorder %v115, %v60
    %vm125 = vcmp.eq.s32.totalorder %v115, %v61
    %v126 = vsel %vm116, 1, 0
    %v127 = vsel %vm117, 1, 0
    %v128 = vsel %vm118, 1, 0
    %v129 = vsel %vm119, 1, 0
    %v130 = vsel %vm120, 1, 0
    %v131 = vsel %vm121, 1, 0
    %v132 = vsel %vm122, 1, 0
    %v133 = vsel %vm123, 1, 0
    %v134 = vsel %vm124, 1, 0
    %v135 = vsel %vm125, 1, 0
    %v136 = vcvt.s32.f32 %v126
    %v137 = vcvt.s32.f32 %v127
    %v138 = vcvt.s32.f32 %v128
    %v139 = vcvt.s32.f32 %v129
    %v140 = vcvt.s32.f32 %v130
    %v141 = vcvt.s32.f32 %v131
    %v142 = vcvt.s32.f32 %v132
    %v143 = vcvt.s32.f32 %v133
    %v144 = vcvt.s32.f32 %v134
    %v145 = vcvt.s32.f32 %v135
    %v146 = vadd.f32 %v98, %v136
    %v147 = vadd.f32 %v99, %v137
    %v148 = vadd.f32 %v100, %v138
    %v149 = vadd.f32 %v101, %v139
    %v150 = vadd.f32 %v102, %v140
    %v151 = vadd.f32 %v103, %v141
    %v152 = vadd.f32 %v104, %v142
    %v153 = vadd.f32 %v105, %v143
    %v154 = vadd.f32 %v106, %v144
    %v155 = vadd.f32 %v107, %v145
    %v156 = vadd.s32 %v54, 256
    %v157 = vadd.s32 %v55, 256
    %158 = vset.pattern.permute.xlu0 2
    %159 = vperm.xlu0 %158, %v156
    %v160 = vpop.permute.xlu0 %159
    %161 = vset.pattern.permute.xlu0 2
    %162 = vperm.xlu0 %161, %v157
    %v163 = vpop.permute.xlu0 %162
    %vm164 = vcmp.eq.s32.totalorder %v160, %v57
    %vm165 = vcmp.eq.s32.totalorder %v160, %v58
    %vm166 = vcmp.eq.s32.totalorder %v160, %v59
    %vm167 = vcmp.eq.s32.totalorder %v160, %v60
    %vm168 = vcmp.eq.s32.totalorder %v160, %v61
    %vm169 = vcmp.eq.s32.totalorder %v163, %v57
    %vm170 = vcmp.eq.s32.totalorder %v163, %v58
    %vm171 = vcmp.eq.s32.totalorder %v163, %v59
    %vm172 = vcmp.eq.s32.totalorder %v163, %v60
    %vm173 = vcmp.eq.s32.totalorder %v163, %v61
    %v174 = vsel %vm164, 1, 0
    %v175 = vsel %vm165, 1, 0
    %v176 = vsel %vm166, 1, 0
    %v177 = vsel %vm167, 1, 0
    %v178 = vsel %vm168, 1, 0
    %v179 = vsel %vm169, 1, 0
    %v180 = vsel %vm170, 1, 0
    %v181 = vsel %vm171, 1, 0
    %v182 = vsel %vm172, 1, 0
    %v183 = vsel %vm173, 1, 0
    %v184 = vcvt.s32.f32 %v174
    %v185 = vcvt.s32.f32 %v175
    %v186 = vcvt.s32.f32 %v176
    %v187 = vcvt.s32.f32 %v177
    %v188 = vcvt.s32.f32 %v178
    %v189 = vcvt.s32.f32 %v179
    %v190 = vcvt.s32.f32 %v180
    %v191 = vcvt.s32.f32 %v181
    %v192 = vcvt.s32.f32 %v182
    %v193 = vcvt.s32.f32 %v183
    %v194 = vadd.f32 %v146, %v184
    %v195 = vadd.f32 %v147, %v185
    %v196 = vadd.f32 %v148, %v186
    %v197 = vadd.f32 %v149, %v187
    %v198 = vadd.f32 %v150, %v188
    %v199 = vadd.f32 %v151, %v189
    %v200 = vadd.f32 %v152, %v190
    %v201 = vadd.f32 %v153, %v191
    %v202 = vadd.f32 %v154, %v192
    %v203 = vadd.f32 %v155, %v193
    %v204 = vadd.s32 %v54, 384
    %v205 = vadd.s32 %v55, 384
    %206 = vset.pattern.permute.xlu0 3
    %207 = vperm.xlu0 %206, %v204
    %v208 = vpop.permute.xlu0 %207
    %209 = vset.pattern.permute.xlu0 3
    %210 = vperm.xlu0 %209, %v205
    %v211 = vpop.permute.xlu0 %210
    %vm212 = vcmp.eq.s32.totalorder %v208, %v57
    %vm213 = vcmp.eq.s32.totalorder %v208, %v58
    %vm214 = vcmp.eq.s32.totalorder %v208, %v59
    %vm215 = vcmp.eq.s32.totalorder %v208, %v60
    %vm216 = vcmp.eq.s32.totalorder %v208, %v61
    %vm217 = vcmp.eq.s32.totalorder %v211, %v57
    %vm218 = vcmp.eq.s32.totalorder %v211, %v58
    %vm219 = vcmp.eq.s32.totalorder %v211, %v59
    %vm220 = vcmp.eq.s32.totalorder %v211, %v60
    %vm221 = vcmp.eq.s32.totalorder %v211, %v61
    %v222 = vsel %vm212, 1, 0
    %v223 = vsel %vm213, 1, 0
    %v224 = vsel %vm214, 1, 0
    %v225 = vsel %vm215, 1, 0
    %v226 = vsel %vm216, 1, 0
    %v227 = vsel %vm217, 1, 0
    %v228 = vsel %vm218, 1, 0
    %v229 = vsel %vm219, 1, 0
    %v230 = vsel %vm220, 1, 0
    %v231 = vsel %vm221, 1, 0
    %v232 = vcvt.s32.f32 %v222
    %v233 = vcvt.s32.f32 %v223
    %v234 = vcvt.s32.f32 %v224
    %v235 = vcvt.s32.f32 %v225
    %v236 = vcvt.s32.f32 %v226
    %v237 = vcvt.s32.f32 %v227
    %v238 = vcvt.s32.f32 %v228
    %v239 = vcvt.s32.f32 %v229
    %v240 = vcvt.s32.f32 %v230
    %v241 = vcvt.s32.f32 %v231
    %v242 = vadd.f32 %v194, %v232
    %v243 = vadd.f32 %v195, %v233
    %v244 = vadd.f32 %v196, %v234
    %v245 = vadd.f32 %v197, %v235
    %v246 = vadd.f32 %v198, %v236
    %v247 = vadd.f32 %v199, %v237
    %v248 = vadd.f32 %v200, %v238
    %v249 = vadd.f32 %v201, %v239
    %v250 = vadd.f32 %v202, %v240
    %v251 = vadd.f32 %v203, %v241
    %v252 = vadd.s32 %v54, 512
    %v253 = vadd.s32 %v55, 512
    %254 = vset.pattern.permute.xlu0 4
    %255 = vperm.xlu0 %254, %v252
    %v256 = vpop.permute.xlu0 %255
    %257 = vset.pattern.permute.xlu0 4
    %258 = vperm.xlu0 %257, %v253
    %v259 = vpop.permute.xlu0 %258
    %vm260 = vcmp.eq.s32.totalorder %v256, %v57
    %vm261 = vcmp.eq.s32.totalorder %v256, %v58
    %vm262 = vcmp.eq.s32.totalorder %v256, %v59
    %vm263 = vcmp.eq.s32.totalorder %v256, %v60
    %vm264 = vcmp.eq.s32.totalorder %v256, %v61
    %vm265 = vcmp.eq.s32.totalorder %v259, %v57
    %vm266 = vcmp.eq.s32.totalorder %v259, %v58
    %vm267 = vcmp.eq.s32.totalorder %v259, %v59
    %vm268 = vcmp.eq.s32.totalorder %v259, %v60
    %vm269 = vcmp.eq.s32.totalorder %v259, %v61
    %v270 = vsel %vm260, 1, 0
    %v271 = vsel %vm261, 1, 0
    %v272 = vsel %vm262, 1, 0
    %v273 = vsel %vm263, 1, 0
    %v274 = vsel %vm264, 1, 0
    %v275 = vsel %vm265, 1, 0
    %v276 = vsel %vm266, 1, 0
    %v277 = vsel %vm267, 1, 0
    %v278 = vsel %vm268, 1, 0
    %v279 = vsel %vm269, 1, 0
    %v280 = vcvt.s32.f32 %v270
    %v281 = vcvt.s32.f32 %v271
    %v282 = vcvt.s32.f32 %v272
    %v283 = vcvt.s32.f32 %v273
    %v284 = vcvt.s32.f32 %v274
    %v285 = vcvt.s32.f32 %v275
    %v286 = vcvt.s32.f32 %v276
    %v287 = vcvt.s32.f32 %v277
    %v288 = vcvt.s32.f32 %v278
    %v289 = vcvt.s32.f32 %v279
    %v290 = vadd.f32 %v242, %v280
    %v291 = vadd.f32 %v243, %v281
    %v292 = vadd.f32 %v244, %v282
    %v293 = vadd.f32 %v245, %v283
    %v294 = vadd.f32 %v246, %v284
    %v295 = vadd.f32 %v247, %v285
    %v296 = vadd.f32 %v248, %v286
    %v297 = vadd.f32 %v249, %v287
    %v298 = vadd.f32 %v250, %v288
    %v299 = vadd.f32 %v251, %v289
    %v300 = vpack.c.bf16 %v295, %v290
    %v301 = vpack.c.bf16 %v296, %v291
    %v302 = vpack.c.bf16 %v297, %v292
    %v303 = vpack.c.bf16 %v298, %v293
    %v304 = vpack.c.bf16 %v299, %v294
    %v305 = vld [vmem:[#allocation3] sm:$0xf]
    %v306 = vld [vmem:[#allocation3 + $0x4] sm:$0xf]
    %v307 = vld [vmem:[#allocation3 + $0x8] sm:$0xf]
    %v308 = vld [vmem:[#allocation3 + $0xc] sm:$0xf]
    %v309 = vld [vmem:[#allocation3 + $0x10] sm:$0xf]
    %v310 = vld [vmem:[#allocation3 + $0x14] sm:$0xf]
    %v311 = vld [vmem:[#allocation3 + $0x18] sm:$0xf]
    %v312 = vld [vmem:[#allocation3 + $0x1c] sm:$0xf]
    %v313 = vld [vmem:[#allocation3 + $0x20] sm:$0xf]
    %v314 = vld [vmem:[#allocation3 + $0x24] sm:$0xf]
    %v315 = vld [vmem:[#allocation3 + $0x28] sm:$0xf]
    %v316 = vld [vmem:[#allocation3 + $0x2c] sm:$0xf]
    %v317 = vld [vmem:[#allocation3 + $0x30] sm:$0xf]
    %v318 = vld [vmem:[#allocation3 + $0x34] sm:$0xf]
    %v319 = vld [vmem:[#allocation3 + $0x38] sm:$0xf]
    %v320 = vld [vmem:[#allocation3 + $0x3c] sm:$0xf]
    %v321 = vld [vmem:[#allocation3 + $0x40] sm:$0xf]
    %v322 = vld [vmem:[#allocation3 + $0x44] sm:$0xf]
    %v323 = vld [vmem:[#allocation3 + $0x48] sm:$0xf]
    %v324 = vld [vmem:[#allocation3 + $0x4c] sm:$0xf]
    %v325 = vld [vmem:[#allocation3 + $0x50] sm:$0xf]
    %v326 = vld [vmem:[#allocation3 + $0x54] sm:$0xf]
    %v327 = vld [vmem:[#allocation3 + $0x58] sm:$0xf]
    %v328 = vld [vmem:[#allocation3 + $0x5c] sm:$0xf]
    %v329 = vld [vmem:[#allocation3 + $0x60] sm:$0xf]
    %v330 = vld [vmem:[#allocation3 + $0x64] sm:$0xf]
    %v331 = vld [vmem:[#allocation3 + $0x68] sm:$0xf]
    %v332 = vld [vmem:[#allocation3 + $0x6c] sm:$0xf]
    %v333 = vld [vmem:[#allocation3 + $0x70] sm:$0xf]
    %v334 = vld [vmem:[#allocation3 + $0x74] sm:$0xf]
    %v335 = vld [vmem:[#allocation3 + $0x78] sm:$0xf]
    %v336 = vld [vmem:[#allocation3 + $0x7c] sm:$0xf]
    %v337 = vld [vmem:[#allocation3 + $0x80] sm:$0xf]
    %v338 = vld [vmem:[#allocation3 + $0x84] sm:$0xf]
    %v339 = vld [vmem:[#allocation3 + $0x88] sm:$0xf]
    %v340 = vld [vmem:[#allocation3 + $0x8c] sm:$0xf]
    %v341 = vld [vmem:[#allocation3 + $0x90] sm:$0xf]
    %v342 = vld [vmem:[#allocation3 + $0x94] sm:$0xf]
    %v343 = vld [vmem:[#allocation3 + $0x98] sm:$0xf]
    %v344 = vld [vmem:[#allocation3 + $0x9c] sm:$0xf]
    %v345 = vld [vmem:[#allocation3 + $0xa0] sm:$0xf]
    %v346 = vld [vmem:[#allocation3 + $0xa4] sm:$0xf]
    %v347 = vld [vmem:[#allocation3 + $0xa8] sm:$0xf]
    %v348 = vld [vmem:[#allocation3 + $0xac] sm:$0xf]
    %v349 = vld [vmem:[#allocation3 + $0xb0] sm:$0xf]
    %v350 = vld [vmem:[#allocation3 + $0xb4] sm:$0xf]
    %v351 = vld [vmem:[#allocation3 + $0xb8] sm:$0xf]
    %v352 = vld [vmem:[#allocation3 + $0xbc] sm:$0xf]
    %v353 = vld [vmem:[#allocation3 + $0xc0] sm:$0xf]
    %v354 = vld [vmem:[#allocation3 + $0xc4] sm:$0xf]
    %v355 = vld [vmem:[#allocation3 + $0xc8] sm:$0xf]
    %v356 = vld [vmem:[#allocation3 + $0xcc] sm:$0xf]
    %v357 = vld [vmem:[#allocation3 + $0xd0] sm:$0xf]
    %v358 = vld [vmem:[#allocation3 + $0xd4] sm:$0xf]
    %v359 = vld [vmem:[#allocation3 + $0xd8] sm:$0xf]
    %v360 = vld [vmem:[#allocation3 + $0xdc] sm:$0xf]
    %v361 = vld [vmem:[#allocation3 + $0xe0] sm:$0xf]
    %v362 = vld [vmem:[#allocation3 + $0xe4] sm:$0xf]
    %v363 = vld [vmem:[#allocation3 + $0xe8] sm:$0xf]
    %v364 = vld [vmem:[#allocation3 + $0xec] sm:$0xf]
    %v365 = vld [vmem:[#allocation3 + $0xf0] sm:$0xf]
    %v366 = vld [vmem:[#allocation3 + $0xf4] sm:$0xf]
    %v367 = vld [vmem:[#allocation3 + $0xf8] sm:$0xf]
    %v368 = vld [vmem:[#allocation3 + $0xfc] sm:$0xf]
    %v369 = vld [vmem:[#allocation3 + $0x100] sm:$0xf]
    %v370 = vld [vmem:[#allocation3 + $0x104] sm:$0xf]
    %v371 = vld [vmem:[#allocation3 + $0x108] sm:$0xf]
    %v372 = vld [vmem:[#allocation3 + $0x10c] sm:$0xf]
    %v373 = vld [vmem:[#allocation3 + $0x110] sm:$0xf]
    %v374 = vld [vmem:[#allocation3 + $0x114] sm:$0xf]
    %v375 = vld [vmem:[#allocation3 + $0x118] sm:$0xf]
    %v376 = vld [vmem:[#allocation3 + $0x11c] sm:$0xf]
    %v377 = vld [vmem:[#allocation3 + $0x120] sm:$0xf]
    %v378 = vld [vmem:[#allocation3 + $0x124] sm:$0xf]
    %v379 = vld [vmem:[#allocation3 + $0x128] sm:$0xf]
    %v380 = vld [vmem:[#allocation3 + $0x12c] sm:$0xf]
    %v381 = vld [vmem:[#allocation3 + $0x130] sm:$0xf]
    %v382 = vld [vmem:[#allocation3 + $0x134] sm:$0xf]
    %v383 = vld [vmem:[#allocation3 + $0x138] sm:$0xf]
    %v384 = vld [vmem:[#allocation3 + $0x13c] sm:$0xf]
    %v385 = vld [vmem:[%s3] sm:$0x1]
    %v387 = vlaneseq
    %v388 = vshrl.u32 %v387, 7
    %v389 = vsub.s32 0, %v388
    %v390 = vrot.slane %v385, %v389
    %v472 = vunpack.c.l.b16 %v305
    %v473 = vunpack.c.l.b16 %v306
    %v474 = vunpack.c.l.b16 %v307
    %v475 = vunpack.c.l.b16 %v308
    %v476 = vunpack.c.l.b16 %v309
    %v477 = vunpack.c.l.b16 %v310
    %v478 = vunpack.c.l.b16 %v311
    %v479 = vunpack.c.l.b16 %v312
    %v480 = vunpack.c.l.b16 %v313
    %v481 = vunpack.c.l.b16 %v314
    %v482 = vunpack.c.l.b16 %v315
    %v483 = vunpack.c.l.b16 %v316
    %v484 = vunpack.c.l.b16 %v317
    %v485 = vunpack.c.l.b16 %v318
    %v486 = vunpack.c.l.b16 %v319
    %v487 = vunpack.c.l.b16 %v320
    %v488 = vunpack.c.l.b16 %v321
    %v489 = vunpack.c.l.b16 %v322
    %v490 = vunpack.c.l.b16 %v323
    %v491 = vunpack.c.l.b16 %v324
    %v492 = vunpack.c.l.b16 %v325
    %v493 = vunpack.c.l.b16 %v326
    %v494 = vunpack.c.l.b16 %v327
    %v495 = vunpack.c.l.b16 %v328
    %v496 = vunpack.c.l.b16 %v329
    %v497 = vunpack.c.l.b16 %v330
    %v498 = vunpack.c.l.b16 %v331
    %v499 = vunpack.c.l.b16 %v332
    %v500 = vunpack.c.l.b16 %v333
    %v501 = vunpack.c.l.b16 %v334
    %v502 = vunpack.c.l.b16 %v335
    %v503 = vunpack.c.l.b16 %v336
    %v504 = vunpack.c.l.b16 %v337
    %v505 = vunpack.c.l.b16 %v338
    %v506 = vunpack.c.l.b16 %v339
    %v507 = vunpack.c.l.b16 %v340
    %v508 = vunpack.c.l.b16 %v341
    %v509 = vunpack.c.l.b16 %v342
    %v510 = vunpack.c.l.b16 %v343
    %v511 = vunpack.c.l.b16 %v344
    %v512 = vunpack.c.l.b16 %v345
    %v513 = vunpack.c.l.b16 %v346
    %v514 = vunpack.c.l.b16 %v347
    %v515 = vunpack.c.l.b16 %v348
    %v516 = vunpack.c.l.b16 %v349
    %v517 = vunpack.c.l.b16 %v350
    %v518 = vunpack.c.l.b16 %v351
    %v519 = vunpack.c.l.b16 %v352
    %v520 = vunpack.c.l.b16 %v353
    %v521 = vunpack.c.l.b16 %v354
    %v522 = vunpack.c.l.b16 %v355
    %v523 = vunpack.c.l.b16 %v356
    %v524 = vunpack.c.l.b16 %v357
    %v525 = vunpack.c.l.b16 %v358
    %v526 = vunpack.c.l.b16 %v359
    %v527 = vunpack.c.l.b16 %v360
    %v528 = vunpack.c.l.b16 %v361
    %v529 = vunpack.c.l.b16 %v362
    %v530 = vunpack.c.l.b16 %v363
    %v531 = vunpack.c.l.b16 %v364
    %v532 = vunpack.c.l.b16 %v365
    %v533 = vunpack.c.l.b16 %v366
    %v534 = vunpack.c.l.b16 %v367
    %v535 = vunpack.c.l.b16 %v368
    %v536 = vunpack.c.l.b16 %v369
    %v537 = vunpack.c.l.b16 %v370
    %v538 = vunpack.c.l.b16 %v371
    %v539 = vunpack.c.l.b16 %v372
    %v540 = vunpack.c.l.b16 %v373
    %v541 = vunpack.c.l.b16 %v374
    %v542 = vunpack.c.l.b16 %v375
    %v543 = vunpack.c.l.b16 %v376
    %v544 = vunpack.c.l.b16 %v377
    %v545 = vunpack.c.l.b16 %v378
    %v546 = vunpack.c.l.b16 %v379
    %v547 = vunpack.c.l.b16 %v380
    %v548 = vunpack.c.l.b16 %v381
    %v549 = vunpack.c.l.b16 %v382
    %v550 = vunpack.c.l.b16 %v383
    %v551 = vunpack.c.l.b16 %v384
    %v552 = vpack.c.b16 %v473, %v472
    %v553 = vpack.c.b16 %v475, %v474
    %v554 = vpack.c.b16 %v477, %v476
    %v555 = vpack.c.b16 %v479, %v478
    %v556 = vpack.c.b16 %v481, %v480
    %v557 = vpack.c.b16 %v483, %v482
    %v558 = vpack.c.b16 %v485, %v484
    %v559 = vpack.c.b16 %v487, %v486
    %v560 = vpack.c.b16 %v489, %v488
    %v561 = vpack.c.b16 %v491, %v490
    %v562 = vpack.c.b16 %v493, %v492
    %v563 = vpack.c.b16 %v495, %v494
    %v564 = vpack.c.b16 %v497, %v496
    %v565 = vpack.c.b16 %v499, %v498
    %v566 = vpack.c.b16 %v501, %v500
    %v567 = vpack.c.b16 %v503, %v502
    %v568 = vpack.c.b16 %v505, %v504
    %v569 = vpack.c.b16 %v507, %v506
    %v570 = vpack.c.b16 %v509, %v508
    %v571 = vpack.c.b16 %v511, %v510
    %v572 = vpack.c.b16 %v513, %v512
    %v573 = vpack.c.b16 %v515, %v514
    %v574 = vpack.c.b16 %v517, %v516
    %v575 = vpack.c.b16 %v519, %v518
    %v576 = vpack.c.b16 %v521, %v520
    %v577 = vpack.c.b16 %v523, %v522
    %v578 = vpack.c.b16 %v525, %v524
    %v579 = vpack.c.b16 %v527, %v526
    %v580 = vpack.c.b16 %v529, %v528
    %v581 = vpack.c.b16 %v531, %v530
    %v582 = vpack.c.b16 %v533, %v532
    %v583 = vpack.c.b16 %v535, %v534
    %v584 = vpack.c.b16 %v537, %v536
    %v585 = vpack.c.b16 %v539, %v538
    %v586 = vpack.c.b16 %v541, %v540
    %v587 = vpack.c.b16 %v543, %v542
    %v588 = vpack.c.b16 %v545, %v544
    %v589 = vpack.c.b16 %v547, %v546
    %v590 = vpack.c.b16 %v549, %v548
    %v591 = vpack.c.b16 %v551, %v550
    %632 = vmatprep.subr.bf16.mxu0 0
    %633 = vmatpush1.bf16.msra.mxu0 %v552
    %634 = vmatprep.subr.bf16.mxu0 0
    %635 = vmatpush1.bf16.msra.mxu0 %v553
    %636 = vmatprep.subr.bf16.mxu0 0
    %637 = vmatpush1.bf16.msra.mxu0 %v554
    %638 = vmatprep.subr.bf16.mxu0 0
    %639 = vmatpush1.bf16.msra.mxu0 %v555
    %640 = vmatprep.subr.bf16.mxu0 0
    %641 = vmatpush1.bf16.msra.mxu0 %v556
    %642 = vmatprep.subr.bf16.mxu0 0
    %643 = vmatpush1.bf16.msra.mxu0 %v557
    %644 = vmatprep.subr.bf16.mxu0 0
    %645 = vmatpush1.bf16.msra.mxu0 %v558
    %646 = vmatprep.subr.bf16.mxu0 0
    %647 = vmatpush1.bf16.msra.mxu0 %v559
    %648 = vmatprep.subr.bf16.mxu0 0
    %649 = vmatpush1.bf16.msra.mxu0 %v560
    %650 = vmatprep.subr.bf16.mxu0 0
    %651 = vmatpush1.bf16.msra.mxu0 %v561
    %652 = vmatprep.subr.bf16.mxu0 0
    %653 = vmatpush1.bf16.msra.mxu0 %v562
    %654 = vmatprep.subr.bf16.mxu0 0
    %655 = vmatpush1.bf16.msra.mxu0 %v563
    %656 = vmatprep.subr.bf16.mxu0 0
    %657 = vmatpush1.bf16.msra.mxu0 %v564
    %658 = vmatprep.subr.bf16.mxu0 0
    %659 = vmatpush1.bf16.msra.mxu0 %v565
    %660 = vmatprep.subr.bf16.mxu0 0
    %661 = vmatpush1.bf16.msra.mxu0 %v566
    %662 = vmatprep.subr.bf16.mxu0 0
    %663 = vmatpush1.bf16.msra.mxu0 %v567
    %664 = vmatprep.mubr.bf16.mxu0 %v301
    %665 = vmatmul.mubr.bf16.gmra.mrb[0].mxu0 %v300
    %v666 = vpop.f32.mrb[0].mxu0
    %v667 = vadd.f32 %v390, %v666
    %v668 = vpop.f32.mrb[0].mxu0
    %v669 = vpop.f32.mrb[0].mxu0
    %v670 = vadd.f32 %v390, %v669
    %v671 = vpop.f32.mrb[0].mxu0
    %672 = vdwg.mxu0
    %673 = vmatprep.subr.bf16.mxu0 0
    %674 = vmatpush1.bf16.msra.mxu0 %v568
    %675 = vmatprep.subr.bf16.mxu0 0
    %676 = vmatpush1.bf16.msra.mxu0 %v569
    %677 = vmatprep.subr.bf16.mxu0 0
    %678 = vmatpush1.bf16.msra.mxu0 %v570
    %679 = vmatprep.subr.bf16.mxu0 0
    %680 = vmatpush1.bf16.msra.mxu0 %v571
    %681 = vmatprep.subr.bf16.mxu0 0
    %682 = vmatpush1.bf16.msra.mxu0 %v572
    %683 = vmatprep.subr.bf16.mxu0 0
    %684 = vmatpush1.bf16.msra.mxu0 %v573
    %685 = vmatprep.subr.bf16.mxu0 0
    %686 = vmatpush1.bf16.msra.mxu0 %v574
    %687 = vmatprep.subr.bf16.mxu0 0
    %688 = vmatpush1.bf16.msra.mxu0 %v575
    %689 = vmatprep.subr.bf16.mxu0 0
    %690 = vmatpush1.bf16.msra.mxu0 %v576
    %691 = vmatprep.subr.bf16.mxu0 0
    %692 = vmatpush1.bf16.msra.mxu0 %v577
    %693 = vmatprep.subr.bf16.mxu0 0
    %694 = vmatpush1.bf16.msra.mxu0 %v578
    %695 = vmatprep.subr.bf16.mxu0 0
    %696 = vmatpush1.bf16.msra.mxu0 %v579
    %697 = vmatprep.subr.bf16.mxu0 0
    %698 = vmatpush1.bf16.msra.mxu0 %v580
    %699 = vmatprep.subr.bf16.mxu0 0
    %700 = vmatpush1.bf16.msra.mxu0 %v581
    %701 = vmatprep.subr.bf16.mxu0 0
    %702 = vmatpush1.bf16.msra.mxu0 %v582
    %703 = vmatprep.subr.bf16.mxu0 0
    %704 = vmatpush1.bf16.msra.mxu0 %v583
    %705 = vmatprep.mubr.bf16.mxu0 %v303
    %706 = vmatmul.mubr.bf16.gmra.mrb[0].mxu0 %v302
    %v707 = vpop.f32.mrb[0].mxu0
    %v708 = vadd.f32 %v667, %v707
    %v709 = vpop.f32.mrb[0].mxu0
    %v710 = vpop.f32.mrb[0].mxu0
    %v711 = vadd.f32 %v670, %v710
    %v712 = vpop.f32.mrb[0].mxu0
    %713 = vdwg.mxu0
    %714 = vmatprep.subr.bf16.mxu0 0
    %715 = vmatpush1.bf16.msra.mxu0 %v584
    %716 = vmatprep.subr.bf16.mxu0 0
    %717 = vmatpush1.bf16.msra.mxu0 %v585
    %718 = vmatprep.subr.bf16.mxu0 0
    %719 = vmatpush1.bf16.msra.mxu0 %v586
    %720 = vmatprep.subr.bf16.mxu0 0
    %721 = vmatpush1.bf16.msra.mxu0 %v587
    %722 = vmatprep.subr.bf16.mxu0 0
    %723 = vmatpush1.bf16.msra.mxu0 %v588
    %724 = vmatprep.subr.bf16.mxu0 0
    %725 = vmatpush1.bf16.msra.mxu0 %v589
    %726 = vmatprep.subr.bf16.mxu0 0
    %727 = vmatpush1.bf16.msra.mxu0 %v590
    %728 = vmatprep.subr.bf16.mxu0 0
    %729 = vmatpush1.bf16.msra.mxu0 %v591
    %730 = vmatprep.subr.bf16.mxu0 0
    %731 = vmatpush1.bf16.msra.mxu0 0
    %732 = vmatprep.subr.bf16.mxu0 0
    %733 = vmatpush1.bf16.msra.mxu0 0
    %734 = vmatprep.subr.bf16.mxu0 0
    %735 = vmatpush1.bf16.msra.mxu0 0
    %736 = vmatprep.subr.bf16.mxu0 0
    %737 = vmatpush1.bf16.msra.mxu0 0
    %738 = vmatprep.subr.bf16.mxu0 0
    %739 = vmatpush1.bf16.msra.mxu0 0
    %740 = vmatprep.subr.bf16.mxu0 0
    %741 = vmatpush1.bf16.msra.mxu0 0
    %742 = vmatprep.subr.bf16.mxu0 0
    %743 = vmatpush1.bf16.msra.mxu0 0
    %744 = vmatprep.subr.bf16.mxu0 0
    %745 = vmatpush1.bf16.msra.mxu0 0
    %746 = vmatprep.mubr.bf16.mxu0 0
    %747 = vmatmul.mubr.bf16.gmra.mrb[0].mxu0 %v304
    %v748 = vpop.f32.mrb[0].mxu0
    %v749 = vadd.f32 %v708, %v748
    %v750 = vpop.f32.mrb[0].mxu0
    %v751 = vpop.f32.mrb[0].mxu0
    %v752 = vadd.f32 %v711, %v751
    %v753 = vpop.f32.mrb[0].mxu0
    %754 = vdwg.mxu0
    %v755 = vtanh.pop %v749
    %v756 = vtanh.pop %v752
    %s757 = smul.u32 0, 16
    %v758 = vlaneseq
    %v759 = vshrl.u32 %v758, 7
    %v760 = vadd.s32 %v759, 8
    %v761 = vstv %s757
    %v762 = vadd.s32 %v759, %v761
    %v763 = vadd.s32 %v760, %v761
    %v764 = vmul.u32 %v762, 128
    %v765 = vmul.u32 %v763, 128
    %v766 = vadd.s32 %v764, %v57
    %v767 = vadd.s32 %v765, %v57
    %s768 = sld [smem:[#allocation2]]
    %s769 = smul.u32 %s768, 2654435761
    %v770 = vstv %s769
    %v771 = vadd.s32 %v766, %v770
    %v772 = vadd.s32 %v767, %v770
    %v773 = vshrl.u32 %v771, 16
    %v774 = vshrl.u32 %v772, 16
    %v775 = vxor.u32 %v771, %v773
    %v776 = vxor.u32 %v772, %v774
    %v777 = vmul.u32 %v775, 2146121005
    %v778 = vmul.u32 %v776, 2146121005
    %v779 = vshrl.u32 %v777, 15
    %v780 = vshrl.u32 %v778, 15
    %v781 = vxor.u32 %v777, %v779
    %v782 = vxor.u32 %v778, %v780
    %v783 = vmul.u32 %v781, 2221713035
    %v784 = vmul.u32 %v782, 2221713035
    %v785 = vshrl.u32 %v783, 16
    %v786 = vshrl.u32 %v784, 16
    %v787 = vxor.u32 %v783, %v785
    %v788 = vxor.u32 %v784, %v786
    %v789 = vshrl.u32 %v787, 31
    %v790 = vshrl.u32 %v788, 31
    %vm791 = vcmp.eq.s32.totalorder %v789, 0
    %vm792 = vcmp.eq.s32.totalorder %v790, 0
    %v793 = vmul.f32 %v755, 2.0
    %v794 = vmul.f32 %v756, 2.0
    %v795 = vsel %vm791, %v793, 0.0
    %v796 = vsel %vm792, %v794, 0.0
    %v797 = vld [vmem:[#allocation6] sm:$0xff]
    %v798 = vld [vmem:[#allocation6 + $0x8] sm:$0xff]
    %v799 = vld [vmem:[#allocation6 + $0x10] sm:$0xff]
    %v800 = vld [vmem:[#allocation6 + $0x18] sm:$0xff]
    %v801 = vld [vmem:[#allocation6 + $0x20] sm:$0xff]
    %v802 = vld [vmem:[#allocation6 + $0x28] sm:$0xff]
    %v803 = vld [vmem:[#allocation6 + $0x30] sm:$0xff]
    %v804 = vld [vmem:[#allocation6 + $0x38] sm:$0xff]
    %v805 = vld [vmem:[#allocation6 + $0x40] sm:$0xff]
    %v806 = vld [vmem:[#allocation6 + $0x48] sm:$0xff]
    %v807 = vld [vmem:[#allocation6 + $0x50] sm:$0xff]
    %v808 = vld [vmem:[#allocation6 + $0x58] sm:$0xff]
    %v809 = vld [vmem:[#allocation6 + $0x60] sm:$0xff]
    %v810 = vld [vmem:[#allocation6 + $0x68] sm:$0xff]
    %v811 = vld [vmem:[#allocation6 + $0x70] sm:$0xff]
    %v812 = vld [vmem:[#allocation6 + $0x78] sm:$0xff]
    %v813 = vld [vmem:[%s5] sm:$0x1]
    %v815 = vlaneseq
    %v816 = vshrl.u32 %v815, 7
    %v817 = vsub.s32 0, %v816
    %v818 = vrot.slane %v813, %v817
    %820 = vmatprep.subr.mxu0 0.0
    %821 = vmatpush1.msra.mxu0 %v797
    %822 = vmatprep.subr.mxu0 0.0
    %823 = vmatpush1.msra.mxu0 %v798
    %824 = vmatprep.subr.mxu0 0.0
    %825 = vmatpush1.msra.mxu0 %v799
    %826 = vmatprep.subr.mxu0 0.0
    %827 = vmatpush1.msra.mxu0 %v800
    %828 = vmatprep.subr.mxu0 0.0
    %829 = vmatpush1.msra.mxu0 %v801
    %830 = vmatprep.subr.mxu0 0.0
    %831 = vmatpush1.msra.mxu0 %v802
    %832 = vmatprep.subr.mxu0 0.0
    %833 = vmatpush1.msra.mxu0 %v803
    %834 = vmatprep.subr.mxu0 0.0
    %835 = vmatpush1.msra.mxu0 %v804
    %836 = vmatprep.subr.mxu0 0.0
    %837 = vmatpush1.msra.mxu0 %v805
    %838 = vmatprep.subr.mxu0 0.0
    %839 = vmatpush1.msra.mxu0 %v806
    %840 = vmatprep.subr.mxu0 0.0
    %841 = vmatpush1.msra.mxu0 %v807
    %842 = vmatprep.subr.mxu0 0.0
    %843 = vmatpush1.msra.mxu0 %v808
    %844 = vmatprep.subr.mxu0 0.0
    %845 = vmatpush1.msra.mxu0 %v809
    %846 = vmatprep.subr.mxu0 0.0
    %847 = vmatpush1.msra.mxu0 %v810
    %848 = vmatprep.subr.mxu0 0.0
    %849 = vmatpush1.msra.mxu0 %v811
    %850 = vmatprep.subr.mxu0 0.0
    %851 = vmatpush1.msra.mxu0 %v812
    %852 = vmatprep.subr.mxu0 0.0
    %853 = vmatpush1.msra.mxu0 0.0
    %854 = vmatprep.subr.mxu0 0.0
    %855 = vmatpush1.msra.mxu0 0.0
    %856 = vmatprep.subr.mxu0 0.0
    %857 = vmatpush1.msra.mxu0 0.0
    %858 = vmatprep.subr.mxu0 0.0
    %859 = vmatpush1.msra.mxu0 0.0
    %860 = vmatprep.subr.mxu0 0.0
    %861 = vmatpush1.msra.mxu0 0.0
    %862 = vmatprep.subr.mxu0 0.0
    %863 = vmatpush1.msra.mxu0 0.0
    %864 = vmatprep.subr.mxu0 0.0
    %865 = vmatpush1.msra.mxu0 0.0
    %866 = vmatprep.subr.mxu0 0.0
    %867 = vmatpush1.msra.mxu0 0.0
    %868 = vmatprep.subr.mxu0 0.0
    %869 = vmatpush1.msra.mxu0 0.0
    %870 = vmatprep.subr.mxu0 0.0
    %871 = vmatpush1.msra.mxu0 0.0
    %872 = vmatprep.subr.mxu0 0.0
    %873 = vmatpush1.msra.mxu0 0.0
    %874 = vmatprep.subr.mxu0 0.0
    %875 = vmatpush1.msra.mxu0 0.0
    %876 = vmatprep.subr.mxu0 0.0
    %877 = vmatpush1.msra.mxu0 0.0
    %878 = vmatprep.subr.mxu0 0.0
    %879 = vmatpush1.msra.mxu0 0.0
    %880 = vmatprep.subr.mxu0 0.0
    %881 = vmatpush1.msra.mxu0 0.0
    %882 = vmatprep.subr.mxu0 0.0
    %883 = vmatpush1.msra.mxu0 0.0
    %884 = vmatprep.mubr.f32.mxu0 0.0
    %885 = vmatmul.mubr.f32.gmra.mrb[0].mxu0 %v795
    %v886 = vpop.f32.mrb[0].mxu0
    %v887 = vadd.f32 %v818, %v886
    %v888 = vpop.f32.mrb[0].mxu0
    %889 = vmatprep.mubr.f32.mxu0 0.0
    %890 = vmatmul.mubr.f32.gmra.mrb[0].mxu0 %v796
    %v891 = vpop.f32.mrb[0].mxu0
    %v892 = vadd.f32 %v818, %v891
    %v893 = vpop.f32.mrb[0].mxu0
    %894 = vdwg.mxu0
    %895 = vmax.xlane.f32.xlu0 %v887
    %v896 = vpop.xlane.xlu0 %895
    %897 = vmax.xlane.f32.xlu0 %v892
    %v898 = vpop.xlane.xlu0 %897
    %v899 = vsub.f32 %v887, %v896
    %v900 = vsub.f32 %v892, %v898
    %v901 = vmul.f32 %v899, 1.442695
    %v902 = vpow.pop %v901
    %v903 = vmul.f32 %v900, 1.442695
    %v904 = vpow.pop %v903
    %905 = vadd.xlane.f32.xlu0 %v902
    %v906 = vpop.xlane.xlu0 %905
    %907 = vadd.xlane.f32.xlu0 %v904
    %v908 = vpop.xlane.xlu0 %907
    %v909 = vrcp.pop %v906
    %v910 = vrcp.pop %v908
    %v911 = vmul.f32 %v902, %v909
    %v912 = vmul.f32 %v904, %v910
    %913 = vst [vmem:[#allocation8] sm:$0xff] %v911
    %914 = vst [vmem:[#allocation8 + $0x8] sm:$0xff] %v912
    // Predicated region
    $region34: #{tpu_custom_call.1} parent=1 // pred_check
      _
    $region35: #{tpu_custom_call.1} parent=1 // pred_check_branch
      %916 = sbr.rel (0) target = $region37
    $region36: #{tpu_custom_call.1} parent=1 // pred_region
      %s918 = ssub.s32 256, 256
      %919 = vsyncadd [#allocation5], %s918
      %s920 = sshll.u32 [#allocation8], 4
      %s921 = int_to_ptr.vmem [resolvable:$true] %s920
      %926 = dma.vmem_to_hbm [thread:$0]  %s921, 256, %s6, [#allocation5], 128, 128, 8
    $region37: #{tpu_custom_call.1} parent=1 // pred_fallthru
      _
    // Predicated region
    $region38: #{tpu_custom_call.1} parent=1 // pred_check
      _
    $region39: #{tpu_custom_call.1} parent=1 // pred_check_branch
      %928 = sbr.rel (0) target = $region41
    $region40: #{tpu_custom_call.1} parent=1 // pred_region
      %929 = dma.done [#allocation5], 256
    $region41: #{tpu_custom_call.1} parent=1 // pred_fallthru
      _
    %930 = vsyncpa [#allocation4], 1
    %931 = vsyncpa [#allocation7], 1
    %932 = vsyncpa [#allocation5], 1

</llo_original>
